<compile_context>
chip_gen: v7x
topology: tpu7x:2x2x1
jax: 0.10.0
libtpu: 0.0.40
codegen_flags: <defaults>
</compile_context>

<pallas_src>
import functools

import jax
import jax.numpy as jnp
from jax.experimental import pallas as pl
from jax.experimental.pallas import tpu as pltpu


def _round_up(x, m):
    return (x + m - 1) // m * m


def _mlp_kernel(x1_ref, x2_ref, w1a_ref, w1b_ref, b1_ref, w2_ref, b2_ref,
                w3_ref, b3_ref, o_ref):
    # bf16 operands for the MXU; f32 accumulation.
    x1 = x1_ref[...].astype(jnp.bfloat16)
    x2 = x2_ref[...].astype(jnp.bfloat16)

    # fc1: split matmul replaces the (x1, x2) concat (no extra HBM round trip).
    h1 = jnp.dot(x1, w1a_ref[...], preferred_element_type=jnp.float32)
    h1 = h1 + jnp.dot(x2, w1b_ref[...], preferred_element_type=jnp.float32)
    h1 = jnp.maximum(h1 + b1_ref[...], 0.0)  # bias + ReLU in f32

    # fc2 + ReLU
    h2 = jnp.dot(h1.astype(jnp.bfloat16), w2_ref[...],
                 preferred_element_type=jnp.float32)
    h2 = jnp.maximum(h2 + b2_ref[...], 0.0)

    # fc3 (single output column): VPU multiply + row reduction instead of a
    # 1-of-256-columns MXU matmul.  w3 is stored as a (1, H2) row.
    logits = jnp.sum(h2 * w3_ref[...], axis=-1, keepdims=True) + b3_ref[...]

    # Sigmoid: exp on the EUP, approx reciprocal on the EUP (free bundle slot).
    o_ref[...] = pl.reciprocal(1.0 + jnp.exp(-logits), approx=True)


@functools.partial(jax.jit, static_argnames=("block_b",))
def base_classifier_forward(x1, x2, params, block_b=512):
    """Fused forward pass. x1: (B, D1), x2: (B, D2) -> (B, 1) float32."""
    w1a, w1b, b1 = params["w1a"], params["w1b"], params["b1"]
    w2, b2 = params["w2"], params["b2"]
    w3, b3 = params["w3"], params["b3"]

    B, D1 = x1.shape
    D2 = x2.shape[1]
    H1 = w1a.shape[1]
    H2 = w2.shape[1]

    # Batch tile: multiple of 8 sublanes, capped at block_b rows.
    TB = min(block_b, _round_up(B, 8))
    Bp = _round_up(B, TB)
    if Bp != B:
        x1 = jnp.pad(x1, ((0, Bp - B), (0, 0)))
        x2 = jnp.pad(x2, ((0, Bp - B), (0, 0)))

    grid = (Bp // TB,)
    resident = lambda shape: pl.BlockSpec(shape, lambda i: (0, 0))

    flops = 2 * Bp * ((D1 + D2) * H1 + H1 * H2 + H2)
    bytes_accessed = (
        x1.size * x1.dtype.itemsize + x2.size * x2.dtype.itemsize
        + sum(int(w.size) * w.dtype.itemsize
              for w in (w1a, w1b, b1, w2, b2, w3, b3))
        + Bp * 4  # output
    )
    cost = pl.CostEstimate(flops=flops, transcendentals=2 * Bp,
                           bytes_accessed=bytes_accessed)

    out = pl.pallas_call(
        _mlp_kernel,
        out_shape=jax.ShapeDtypeStruct((Bp, 1), jnp.float32),
        grid=grid,
        in_specs=[
            pl.BlockSpec((TB, D1), lambda i: (i, 0)),   # x1 tile
            pl.BlockSpec((TB, D2), lambda i: (i, 0)),   # x2 tile
            resident((D1, H1)),                         # w1a (bf16)
            resident((D2, H1)),                         # w1b (bf16)
            resident((1, H1)),                          # b1  (f32)
            resident((H1, H2)),                         # w2  (bf16)
            resident((1, H2)),                          # b2  (f32)
            resident((1, H2)),                          # w3 row (f32)
            resident((1, 1)),                           # b3  (f32)
        ],
        # NOTE: (TB, 1) output is lane-sparse; fine at these sizes.  For very
        # large B, emit a lane-dense slab and reshape in the wrapper.
        out_specs=pl.BlockSpec((TB, 1), lambda i: (i, 0)),
        compiler_params=pltpu.CompilerParams(
            dimension_semantics=("parallel",),
        ),
        cost_estimate=cost,
    )(x1, x2, w1a, w1b, b1, w2, b2, w3, b3)
    return out[:B]


def init_params(key, input_size1, input_size2, hidden1=200, hidden2=50):
    """Matches BaseClassifier.__init__ semantics:
       fc1/fc2 weights: kaiming_normal(fan_in, relu) -> std = sqrt(2 / fan_in)
       fc3 weight: zeros
       biases: PyTorch Linear default uniform(-1/sqrt(fan_in), 1/sqrt(fan_in))
       fc1's weight is stored pre-split into the x1 / x2 halves; MXU weights in bf16.
    """
    D = input_size1 + input_size2
    k1, k2, kb1, kb2, kb3 = jax.random.split(key, 5)

    std1 = (2.0 / D) ** 0.5
    std2 = (2.0 / hidden1) ** 0.5
    w1 = std1 * jax.random.normal(k1, (D, hidden1), dtype=jnp.float32)
    w2 = std2 * jax.random.normal(k2, (hidden1, hidden2), dtype=jnp.float32)

    bnd1 = 1.0 / (D ** 0.5)
    bnd2 = 1.0 / (hidden1 ** 0.5)
    bnd3 = 1.0 / (hidden2 ** 0.5)
    b1 = jax.random.uniform(kb1, (1, hidden1), jnp.float32, -bnd1, bnd1)
    b2 = jax.random.uniform(kb2, (1, hidden2), jnp.float32, -bnd2, bnd2)
    b3 = jax.random.uniform(kb3, (1, 1), jnp.float32, -bnd3, bnd3)

    return {
        "w1a": w1[:input_size1].astype(jnp.bfloat16),
        "w1b": w1[input_size1:].astype(jnp.bfloat16),
        "b1": b1,
        "w2": w2.astype(jnp.bfloat16),
        "b2": b2,
        "w3": jnp.zeros((1, hidden2), jnp.float32),  # fc3 weight, stored as a row
        "b3": b3,
    }


if __name__ == "__main__":
    key = jax.random.PRNGKey(0)
    k_x1, k_x2, k_p, k_w3 = jax.random.split(key, 4)

    # Small shapes: batch=80 (not a tile multiple, to exercise padding),
    # x1/x2 have 16 features each, PyTorch default hidden sizes 200/50.
    B, D1, D2 = 80, 16, 16
    H1, H2 = 200, 50

    x1 = jax.random.normal(k_x1, (B, D1), dtype=jnp.float32)
    x2 = jax.random.normal(k_x2, (B, D2), dtype=jnp.float32)
    params = init_params(k_p, D1, D2, hidden1=H1, hidden2=H2)
    # The module zero-inits fc3.weight; use a random one here so the numerical
    # check exercises the whole forward path (not just sigmoid(b3)).
    params["w3"] = 0.1 * jax.random.normal(k_w3, (1, H2), dtype=jnp.float32)

    out = base_classifier_forward(x1, x2, params, block_b=32)  # grid of 3 batch tiles
    jax.block_until_ready(out)

    # Pure-JAX reference with matching bf16 operand casts.
    h1 = jnp.maximum(
        jnp.dot(x1.astype(jnp.bfloat16), params["w1a"],
                preferred_element_type=jnp.float32)
        + jnp.dot(x2.astype(jnp.bfloat16), params["w1b"],
                  preferred_element_type=jnp.float32)
        + params["b1"], 0.0)
    h2 = jnp.maximum(
        jnp.dot(h1.astype(jnp.bfloat16), params["w2"],
                preferred_element_type=jnp.float32)
        + params["b2"], 0.0)
    logits = jnp.sum(h2 * params["w3"], axis=-1, keepdims=True) + params["b3"]
    ref = jax.nn.sigmoid(logits)

    assert out.shape == (B, 1), out.shape
    max_err = float(jnp.max(jnp.abs(out - ref)))
    assert jnp.allclose(out, ref, atol=5e-3, rtol=5e-3), f"mismatch: {max_err}"

    print("KERNEL_OK")
</pallas_src>

<mosaic_0001>
module attributes {stable_mosaic.version = 11 : i64} {
  func.func @_mlp_kernel(%arg0: i32, %arg1: memref<32x16xf32, #tpu.memory_space<vmem>>, %arg2: memref<32x16xf32, #tpu.memory_space<vmem>>, %arg3: memref<16x200xbf16, #tpu.memory_space<vmem>>, %arg4: memref<16x200xbf16, #tpu.memory_space<vmem>>, %arg5: memref<1x200xf32, #tpu.memory_space<vmem>>, %arg6: memref<200x50xbf16, #tpu.memory_space<vmem>>, %arg7: memref<1x50xf32, #tpu.memory_space<vmem>>, %arg8: memref<1x50xf32, #tpu.memory_space<vmem>>, %arg9: memref<1x1xf32, #tpu.memory_space<vmem>>, %arg10: memref<32x1xf32, #tpu.memory_space<vmem>>) attributes {dimension_semantics = [#tpu.dimension_semantics<parallel>], iteration_bounds = array<i64: 3>, scalar_prefetch = 0 : i64, scratch_operands = 0 : i64, tpu.core_type = #tpu.core_type<tc>, window_params = [{transform_indices = @transform_0, window_bounds = array<i64: 32, 16>}, {transform_indices = @transform_1, window_bounds = array<i64: 32, 16>}, {pipeline_mode = #tpu.pipeline_mode<synchronous>, transform_indices = @transform_2, window_bounds = array<i64: 16, 200>}, {pipeline_mode = #tpu.pipeline_mode<synchronous>, transform_indices = @transform_3, window_bounds = array<i64: 16, 200>}, {pipeline_mode = #tpu.pipeline_mode<synchronous>, transform_indices = @transform_4, window_bounds = array<i64: 1, 200>}, {pipeline_mode = #tpu.pipeline_mode<synchronous>, transform_indices = @transform_5, window_bounds = array<i64: 200, 50>}, {pipeline_mode = #tpu.pipeline_mode<synchronous>, transform_indices = @transform_6, window_bounds = array<i64: 1, 50>}, {pipeline_mode = #tpu.pipeline_mode<synchronous>, transform_indices = @transform_7, window_bounds = array<i64: 1, 50>}, {pipeline_mode = #tpu.pipeline_mode<synchronous>, transform_indices = @transform_8, window_bounds = array<i64: 1, 1>}, {transform_indices = @transform_9, window_bounds = array<i64: 32, 1>}]} {
    %c0 = arith.constant 0 : index
    %c0_0 = arith.constant 0 : index
    %0 = vector.load %arg1[%c0, %c0_0] : memref<32x16xf32, #tpu.memory_space<vmem>>, vector<32x16xf32>
    %1 = arith.truncf %0 : vector<32x16xf32> to vector<32x16xbf16>
    %c0_1 = arith.constant 0 : index
    %c0_2 = arith.constant 0 : index
    %2 = vector.load %arg2[%c0_1, %c0_2] : memref<32x16xf32, #tpu.memory_space<vmem>>, vector<32x16xf32>
    %3 = arith.truncf %2 : vector<32x16xf32> to vector<32x16xbf16>
    %c0_3 = arith.constant 0 : index
    %c0_4 = arith.constant 0 : index
    %4 = vector.load %arg3[%c0_3, %c0_4] : memref<16x200xbf16, #tpu.memory_space<vmem>>, vector<16x200xbf16>
    %cst = arith.constant dense<0.000000e+00> : vector<32x200xf32>
    %5 = tpu.matmul %1, %4, %cst {dimension_numbers = #tpu.dot_dimension_numbers<[1], [0], [0], [1], [0, 0, 1, 1], [], []>} : vector<32x16xbf16>, vector<16x200xbf16>, vector<32x200xf32> -> vector<32x200xf32>
    %c0_5 = arith.constant 0 : index
    %c0_6 = arith.constant 0 : index
    %6 = vector.load %arg4[%c0_5, %c0_6] : memref<16x200xbf16, #tpu.memory_space<vmem>>, vector<16x200xbf16>
    %cst_7 = arith.constant dense<0.000000e+00> : vector<32x200xf32>
    %7 = tpu.matmul %3, %6, %cst_7 {dimension_numbers = #tpu.dot_dimension_numbers<[1], [0], [0], [1], [0, 0, 1, 1], [], []>} : vector<32x16xbf16>, vector<16x200xbf16>, vector<32x200xf32> -> vector<32x200xf32>
    %8 = arith.addf %5, %7 : vector<32x200xf32>
    %c0_8 = arith.constant 0 : index
    %c0_9 = arith.constant 0 : index
    %9 = vector.load %arg5[%c0_8, %c0_9] : memref<1x200xf32, #tpu.memory_space<vmem>>, vector<1x200xf32>
    %10 = vector.broadcast %9 : vector<1x200xf32> to vector<32x200xf32>
    %11 = arith.addf %8, %10 : vector<32x200xf32>
    %cst_10 = arith.constant 0.000000e+00 : f32
    %12 = vector.broadcast %cst_10 : f32 to vector<32x200xf32>
    %13 = arith.maximumf %11, %12 : vector<32x200xf32>
    %14 = arith.truncf %13 : vector<32x200xf32> to vector<32x200xbf16>
    %c0_11 = arith.constant 0 : index
    %c0_12 = arith.constant 0 : index
    %15 = vector.load %arg6[%c0_11, %c0_12] : memref<200x50xbf16, #tpu.memory_space<vmem>>, vector<200x50xbf16>
    %cst_13 = arith.constant dense<0.000000e+00> : vector<32x50xf32>
    %16 = tpu.matmul %14, %15, %cst_13 {dimension_numbers = #tpu.dot_dimension_numbers<[1], [0], [0], [1], [0, 0, 1, 1], [], []>} : vector<32x200xbf16>, vector<200x50xbf16>, vector<32x50xf32> -> vector<32x50xf32>
    %c0_14 = arith.constant 0 : index
    %c0_15 = arith.constant 0 : index
    %17 = vector.load %arg7[%c0_14, %c0_15] : memref<1x50xf32, #tpu.memory_space<vmem>>, vector<1x50xf32>
    %18 = vector.broadcast %17 : vector<1x50xf32> to vector<32x50xf32>
    %19 = arith.addf %16, %18 : vector<32x50xf32>
    %cst_16 = arith.constant 0.000000e+00 : f32
    %20 = vector.broadcast %cst_16 : f32 to vector<32x50xf32>
    %21 = arith.maximumf %19, %20 : vector<32x50xf32>
    %c0_17 = arith.constant 0 : index
    %c0_18 = arith.constant 0 : index
    %22 = vector.load %arg8[%c0_17, %c0_18] : memref<1x50xf32, #tpu.memory_space<vmem>>, vector<1x50xf32>
    %23 = vector.broadcast %22 : vector<1x50xf32> to vector<32x50xf32>
    %24 = arith.mulf %21, %23 : vector<32x50xf32>
    %cst_19 = arith.constant dense<0.000000e+00> : vector<32xf32>
    %25 = vector.multi_reduction <add>, %24, %cst_19 [1] : vector<32x50xf32> to vector<32xf32>
    %26 = vector.shape_cast %25 : vector<32xf32> to vector<32x1xf32>
    %c0_20 = arith.constant 0 : index
    %c0_21 = arith.constant 0 : index
    %27 = vector.load %arg9[%c0_20, %c0_21] : memref<1x1xf32, #tpu.memory_space<vmem>>, vector<1x1xf32>
    %28 = vector.broadcast %27 : vector<1x1xf32> to vector<32x1xf32>
    %29 = arith.addf %26, %28 : vector<32x1xf32>
    %cst_22 = arith.constant 0.000000e+00 : f32
    %30 = vector.broadcast %cst_22 : f32 to vector<32x1xf32>
    %31 = arith.subf %30, %29 : vector<32x1xf32>
    %32 = math.exp %31 : vector<32x1xf32>
    %cst_23 = arith.constant 1.000000e+00 : f32
    %33 = vector.broadcast %cst_23 : f32 to vector<32x1xf32>
    %34 = arith.addf %33, %32 : vector<32x1xf32>
    %35 = tpu.reciprocal %34 {approx = true} : vector<32x1xf32> -> vector<32x1xf32>
    %c0_24 = arith.constant 0 : index
    %c0_25 = arith.constant 0 : index
    %36 = vector.load %arg10[%c0_24, %c0_25] : memref<32x1xf32, #tpu.memory_space<vmem>>, vector<32x1xf32>
    tpu.vector_store %arg10[%c0_24, %c0_25], %35 {strides = array<i32>} : memref<32x1xf32, #tpu.memory_space<vmem>>, vector<32x1xf32>,
    return
  }
  func.func @transform_0(%arg0: i32) -> (i32, i32) {
    %c0_i32 = arith.constant 0 : i32
    %c0_i32_0 = arith.constant 0 : i32
    return %arg0, %c0_i32 : i32, i32
  }
  func.func @transform_1(%arg0: i32) -> (i32, i32) {
    %c0_i32 = arith.constant 0 : i32
    %c0_i32_0 = arith.constant 0 : i32
    return %arg0, %c0_i32 : i32, i32
  }
  func.func @transform_2(%arg0: i32) -> (i32, i32) {
    %c0_i32 = arith.constant 0 : i32
    %c0_i32_0 = arith.constant 0 : i32
    %c0_i32_1 = arith.constant 0 : i32
    return %c0_i32, %c0_i32_0 : i32, i32
  }
  func.func @transform_3(%arg0: i32) -> (i32, i32) {
    %c0_i32 = arith.constant 0 : i32
    %c0_i32_0 = arith.constant 0 : i32
    %c0_i32_1 = arith.constant 0 : i32
    return %c0_i32, %c0_i32_0 : i32, i32
  }
  func.func @transform_4(%arg0: i32) -> (i32, i32) {
    %c0_i32 = arith.constant 0 : i32
    %c0_i32_0 = arith.constant 0 : i32
    %c0_i32_1 = arith.constant 0 : i32
    return %c0_i32, %c0_i32_0 : i32, i32
  }
  func.func @transform_5(%arg0: i32) -> (i32, i32) {
    %c0_i32 = arith.constant 0 : i32
    %c0_i32_0 = arith.constant 0 : i32
    %c0_i32_1 = arith.constant 0 : i32
    return %c0_i32, %c0_i32_0 : i32, i32
  }
  func.func @transform_6(%arg0: i32) -> (i32, i32) {
    %c0_i32 = arith.constant 0 : i32
    %c0_i32_0 = arith.constant 0 : i32
    %c0_i32_1 = arith.constant 0 : i32
    return %c0_i32, %c0_i32_0 : i32, i32
  }
  func.func @transform_7(%arg0: i32) -> (i32, i32) {
    %c0_i32 = arith.constant 0 : i32
    %c0_i32_0 = arith.constant 0 : i32
    %c0_i32_1 = arith.constant 0 : i32
    return %c0_i32, %c0_i32_0 : i32, i32
  }
  func.func @transform_8(%arg0: i32) -> (i32, i32) {
    %c0_i32 = arith.constant 0 : i32
    %c0_i32_0 = arith.constant 0 : i32
    %c0_i32_1 = arith.constant 0 : i32
    return %c0_i32, %c0_i32_0 : i32, i32
  }
  func.func @transform_9(%arg0: i32) -> (i32, i32) {
    %c0_i32 = arith.constant 0 : i32
    %c0_i32_0 = arith.constant 0 : i32
    return %arg0, %c0_i32 : i32, i32
  }
}

</mosaic_0001>

<llo_original>
// kernel: base_classifier_forward.1
$region0: #{base_classifier_forward.1}
  #allocation0 [shape = 'u32[]', space=smem, size = 0x4, offset = 0x4, fixed_abs, tag = 'smem constant byte address 0x4 - core index']
  #allocation1 [shape = 'u32[144,128]{1,0:T(1,128)}', space=vmem, size = 0x12000, scoped, tag = 'internal scratch']
  #allocation2 [shape = 'f32[1,1]{1,0:T(1,128)S(1)}', space=vmem, size = 0x200, scoped, tag = 'scoped memory for base_classifier_forward.1']
  %s0 = inlined_call_operand.vmem [shape: f32[96,16], index: 0, kind: input, shape index: {}]
  %s1 = inlined_call_operand.vmem [shape: f32[96,16], index: 1, kind: input, shape index: {}]
  %s2 = inlined_call_operand.vmem [shape: bf16[16,200], index: 2, kind: input, shape index: {}]
  %s3 = inlined_call_operand.vmem [shape: bf16[16,200], index: 3, kind: input, shape index: {}]
  %s4 = inlined_call_operand.vmem [shape: f32[1,200], index: 4, kind: input, shape index: {}]
  %s5 = inlined_call_operand.vmem [shape: bf16[200,50], index: 5, kind: input, shape index: {}]
  %s6 = inlined_call_operand.vmem [shape: f32[1,50], index: 6, kind: input, shape index: {}]
  %s7 = inlined_call_operand.vmem [shape: f32[1,50], index: 7, kind: input, shape index: {}]
  %s8 = inlined_call_operand.<no memory space> [shape: f32[1,1], index: 8, kind: input, shape index: {}]
  %s9 = inlined_call_operand.vmem [shape: f32[96,1], index: 9, kind: output, shape index: {}]
  %s10 = sld [smem:[#allocation0]]
  $region69: #{base_classifier_forward.1} parent=0
    _
  %s12 = ssub.s32 1, %s10
  %s13 = scalar_select 0, %s12, %s10
  %v14 = vstv %s8
  %15 = vst [vmem:[#allocation2] sm:$0x1] %v14
  loop: start=0, step=1, limit=5
  $region2: #{base_classifier_forward.1} parent=0 // loop_pre_header
    _
  $region3: #{base_classifier_forward.1} parent=0 // loop_header
    %s17 = sphi 0, %s21
    %p18 = scmp.ge.s32.totalorder %s17, 5
    %s27 = sphi 0, %s29
    %s30 = sphi 0, %s27
    %s31 = sphi 0, %s30
    %s47 = sphi 0, %s31
    %s53 = sphi 0, %s55
    %s56 = sphi 0, %s53
    %s57 = sphi 0, %s56
    %s73 = sphi 0, %s57
    %s77 = sphi 0, %s77
    %s79 = sphi 0, %s77
    %s80 = sphi 0, %s79
    %s94 = sphi 0, %s80
    %s98 = sphi 0, %s98
    %s100 = sphi 0, %s98
    %s101 = sphi 0, %s100
    %s115 = sphi 0, %s101
    %s119 = sphi 0, %s119
    %s121 = sphi 0, %s119
    %s122 = sphi 0, %s121
    %s136 = sphi 0, %s122
    %s140 = sphi 0, %s140
    %s142 = sphi 0, %s140
    %s143 = sphi 0, %s142
    %s157 = sphi 0, %s143
    %s161 = sphi 0, %s161
    %s163 = sphi 0, %s161
    %s164 = sphi 0, %s163
    %s178 = sphi 0, %s164
    %s182 = sphi 0, %s182
    %s184 = sphi 0, %s182
    %s185 = sphi 0, %s184
    %s199 = sphi 0, %s185
    %s203 = sphi 0, %s203
    %s205 = sphi 0, %s203
    %s206 = sphi 0, %s205
    %s220 = sphi 0, %s206
    %s226 = sphi 0, %s228
    %s229 = sphi 0, %s226
    %s230 = sphi 0, %s229
    %s246 = sphi 0, %s230
  $region4: #{base_classifier_forward.1} parent=0 // loop_header_branch
    %20 = sbr.rel (%p18) target = $region8
  $region5: #{base_classifier_forward.1} parent=0 // loop_body
    %s22 = ssub.s32 %s17, 1
    %s23 = ssub.s32 %s17, 2
    %s24 = sadd.s32 %s17, 1
    %s25 = ssub.s32 %s17, %s24
    %p26 = scmp.eq.s32.totalorder %s25, 0
    %s28 = sadd.s32 %s27, 1
    %s29 = scalar_select %p26, %s27, %s28
    %p32 = pneg %p26
    %p33 = scmp.eq.s32.totalorder %s17, 2
    %p34 = por %p32, %p33
    %p35 = scmp.ne.s32.totalorder %s27, %s30
    %p36 = scmp.eq.s32.totalorder %s17, 0
    %p37 = por %p35, %p36
    %p38 = scmp.ne.s32.totalorder %s27, %s30
    %p39 = scmp.eq.s32.totalorder %s22, 2
    %p40 = por %p38, %p39
    %p41 = scmp.ne.s32.totalorder %s30, %s31
    %p42 = scmp.eq.s32.totalorder %s22, 0
    %p43 = por %p41, %p42
    %p44 = scmp.ne.s32.totalorder %s30, %s31
    %p45 = scmp.eq.s32.totalorder %s23, 2
    %p46 = por %p44, %p45
    %p48 = scmp.ne.s32.totalorder %s31, %s47
    %p49 = scmp.eq.s32.totalorder %s23, 0
    %p50 = por %p48, %p49
    %s51 = ssub.s32 %s17, %s24
    %p52 = scmp.eq.s32.totalorder %s51, 0
    %s54 = sadd.s32 %s53, 1
    %s55 = scalar_select %p52, %s53, %s54
    %p58 = pneg %p52
    %p59 = scmp.eq.s32.totalorder %s17, 2
    %p60 = por %p58, %p59
    %p61 = scmp.ne.s32.totalorder %s53, %s56
    %p62 = scmp.eq.s32.totalorder %s17, 0
    %p63 = por %p61, %p62
    %p64 = scmp.ne.s32.totalorder %s53, %s56
    %p65 = scmp.eq.s32.totalorder %s22, 2
    %p66 = por %p64, %p65
    %p67 = scmp.ne.s32.totalorder %s56, %s57
    %p68 = scmp.eq.s32.totalorder %s22, 0
    %p69 = por %p67, %p68
    %p70 = scmp.ne.s32.totalorder %s56, %s57
    %p71 = scmp.eq.s32.totalorder %s23, 2
    %p72 = por %p70, %p71
    %p74 = scmp.ne.s32.totalorder %s57, %s73
    %p75 = scmp.eq.s32.totalorder %s23, 0
    %p76 = por %p74, %p75
    %s78 = sadd.s32 %s77, 1
    %p81 = scmp.eq.s32.totalorder %s17, 2
    %p82 = scmp.ne.s32.totalorder %s77, %s79
    %p83 = scmp.eq.s32.totalorder %s17, 0
    %p84 = por %p82, %p83
    %p85 = scmp.ne.s32.totalorder %s77, %s79
    %p86 = scmp.eq.s32.totalorder %s22, 2
    %p87 = por %p85, %p86
    %p88 = scmp.ne.s32.totalorder %s79, %s80
    %p89 = scmp.eq.s32.totalorder %s22, 0
    %p90 = por %p88, %p89
    %p91 = scmp.ne.s32.totalorder %s79, %s80
    %p92 = scmp.eq.s32.totalorder %s23, 2
    %p93 = por %p91, %p92
    %p95 = scmp.ne.s32.totalorder %s80, %s94
    %p96 = scmp.eq.s32.totalorder %s23, 0
    %p97 = por %p95, %p96
    %s99 = sadd.s32 %s98, 1
    %p102 = scmp.eq.s32.totalorder %s17, 2
    %p103 = scmp.ne.s32.totalorder %s98, %s100
    %p104 = scmp.eq.s32.totalorder %s17, 0
    %p105 = por %p103, %p104
    %p106 = scmp.ne.s32.totalorder %s98, %s100
    %p107 = scmp.eq.s32.totalorder %s22, 2
    %p108 = por %p106, %p107
    %p109 = scmp.ne.s32.totalorder %s100, %s101
    %p110 = scmp.eq.s32.totalorder %s22, 0
    %p111 = por %p109, %p110
    %p112 = scmp.ne.s32.totalorder %s100, %s101
    %p113 = scmp.eq.s32.totalorder %s23, 2
    %p114 = por %p112, %p113
    %p116 = scmp.ne.s32.totalorder %s101, %s115
    %p117 = scmp.eq.s32.totalorder %s23, 0
    %p118 = por %p116, %p117
    %s120 = sadd.s32 %s119, 1
    %p123 = scmp.eq.s32.totalorder %s17, 2
    %p124 = scmp.ne.s32.totalorder %s119, %s121
    %p125 = scmp.eq.s32.totalorder %s17, 0
    %p126 = por %p124, %p125
    %p127 = scmp.ne.s32.totalorder %s119, %s121
    %p128 = scmp.eq.s32.totalorder %s22, 2
    %p129 = por %p127, %p128
    %p130 = scmp.ne.s32.totalorder %s121, %s122
    %p131 = scmp.eq.s32.totalorder %s22, 0
    %p132 = por %p130, %p131
    %p133 = scmp.ne.s32.totalorder %s121, %s122
    %p134 = scmp.eq.s32.totalorder %s23, 2
    %p135 = por %p133, %p134
    %p137 = scmp.ne.s32.totalorder %s122, %s136
    %p138 = scmp.eq.s32.totalorder %s23, 0
    %p139 = por %p137, %p138
    %s141 = sadd.s32 %s140, 1
    %p144 = scmp.eq.s32.totalorder %s17, 2
    %p145 = scmp.ne.s32.totalorder %s140, %s142
    %p146 = scmp.eq.s32.totalorder %s17, 0
    %p147 = por %p145, %p146
    %p148 = scmp.ne.s32.totalorder %s140, %s142
    %p149 = scmp.eq.s32.totalorder %s22, 2
    %p150 = por %p148, %p149
    %p151 = scmp.ne.s32.totalorder %s142, %s143
    %p152 = scmp.eq.s32.totalorder %s22, 0
    %p153 = por %p151, %p152
    %p154 = scmp.ne.s32.totalorder %s142, %s143
    %p155 = scmp.eq.s32.totalorder %s23, 2
    %p156 = por %p154, %p155
    %p158 = scmp.ne.s32.totalorder %s143, %s157
    %p159 = scmp.eq.s32.totalorder %s23, 0
    %p160 = por %p158, %p159
    %s162 = sadd.s32 %s161, 1
    %p165 = scmp.eq.s32.totalorder %s17, 2
    %p166 = scmp.ne.s32.totalorder %s161, %s163
    %p167 = scmp.eq.s32.totalorder %s17, 0
    %p168 = por %p166, %p167
    %p169 = scmp.ne.s32.totalorder %s161, %s163
    %p170 = scmp.eq.s32.totalorder %s22, 2
    %p171 = por %p169, %p170
    %p172 = scmp.ne.s32.totalorder %s163, %s164
    %p173 = scmp.eq.s32.totalorder %s22, 0
    %p174 = por %p172, %p173
    %p175 = scmp.ne.s32.totalorder %s163, %s164
    %p176 = scmp.eq.s32.totalorder %s23, 2
    %p177 = por %p175, %p176
    %p179 = scmp.ne.s32.totalorder %s164, %s178
    %p180 = scmp.eq.s32.totalorder %s23, 0
    %p181 = por %p179, %p180
    %s183 = sadd.s32 %s182, 1
    %p186 = scmp.eq.s32.totalorder %s17, 2
    %p187 = scmp.ne.s32.totalorder %s182, %s184
    %p188 = scmp.eq.s32.totalorder %s17, 0
    %p189 = por %p187, %p188
    %p190 = scmp.ne.s32.totalorder %s182, %s184
    %p191 = scmp.eq.s32.totalorder %s22, 2
    %p192 = por %p190, %p191
    %p193 = scmp.ne.s32.totalorder %s184, %s185
    %p194 = scmp.eq.s32.totalorder %s22, 0
    %p195 = por %p193, %p194
    %p196 = scmp.ne.s32.totalorder %s184, %s185
    %p197 = scmp.eq.s32.totalorder %s23, 2
    %p198 = por %p196, %p197
    %p200 = scmp.ne.s32.totalorder %s185, %s199
    %p201 = scmp.eq.s32.totalorder %s23, 0
    %p202 = por %p200, %p201
    %s204 = sadd.s32 %s203, 1
    %p207 = scmp.eq.s32.totalorder %s17, 2
    %p208 = scmp.ne.s32.totalorder %s203, %s205
    %p209 = scmp.eq.s32.totalorder %s17, 0
    %p210 = por %p208, %p209
    %p211 = scmp.ne.s32.totalorder %s203, %s205
    %p212 = scmp.eq.s32.totalorder %s22, 2
    %p213 = por %p211, %p212
    %p214 = scmp.ne.s32.totalorder %s205, %s206
    %p215 = scmp.eq.s32.totalorder %s22, 0
    %p216 = por %p214, %p215
    %p217 = scmp.ne.s32.totalorder %s205, %s206
    %p218 = scmp.eq.s32.totalorder %s23, 2
    %p219 = por %p217, %p218
    %p221 = scmp.ne.s32.totalorder %s206, %s220
    %p222 = scmp.eq.s32.totalorder %s23, 0
    %p223 = por %p221, %p222
    %s224 = ssub.s32 %s17, %s24
    %p225 = scmp.eq.s32.totalorder %s224, 0
    %s227 = sadd.s32 %s226, 1
    %s228 = scalar_select %p225, %s226, %s227
    %p231 = pneg %p225
    %p232 = scmp.eq.s32.totalorder %s17, 2
    %p233 = por %p231, %p232
    %p234 = scmp.ne.s32.totalorder %s226, %s229
    %p235 = scmp.eq.s32.totalorder %s17, 0
    %p236 = por %p234, %p235
    %p237 = scmp.ne.s32.totalorder %s226, %s229
    %p238 = scmp.eq.s32.totalorder %s22, 2
    %p239 = por %p237, %p238
    %p240 = scmp.ne.s32.totalorder %s229, %s230
    %p241 = scmp.eq.s32.totalorder %s22, 0
    %p242 = por %p240, %p241
    %p243 = scmp.ne.s32.totalorder %s229, %s230
    %p244 = scmp.eq.s32.totalorder %s23, 2
    %p245 = por %p243, %p244
    %p247 = scmp.ne.s32.totalorder %s230, %s246
    %p248 = scmp.eq.s32.totalorder %s23, 0
    %p249 = por %p247, %p248
    %p250 = scmp.le.s32.totalorder 1, %s17
    %p251 = scmp.lt.s32.totalorder %s17, 4
    %p252 = pnand %p250, %p251
    %p253 = pneg %p252
    // Predicated region
    $region9: #{base_classifier_forward.1} parent=5 // pred_check
      _
    $region10: #{base_classifier_forward.1} parent=5 // pred_check_branch
      %255 = sbr.rel (%p252) target = $region12
    $region11: #{base_classifier_forward.1} parent=5 // pred_region
      %s256 = ssub.s32 %s17, 1
      // Predicated region
      $region13: #{base_classifier_forward.1} parent=11 // pred_check
        %p257 = pneg %p90
      $region14: #{base_classifier_forward.1} parent=11 // pred_check_branch
        %259 = sbr.rel (%p257) target = $region16
      $region15: #{base_classifier_forward.1} parent=11 // pred_region
        _
      $region16: #{base_classifier_forward.1} parent=11 // pred_fallthru
        _
      // Predicated region
      $region17: #{base_classifier_forward.1} parent=11 // pred_check
        %p260 = pneg %p111
      $region18: #{base_classifier_forward.1} parent=11 // pred_check_branch
        %262 = sbr.rel (%p260) target = $region20
      $region19: #{base_classifier_forward.1} parent=11 // pred_region
        _
      $region20: #{base_classifier_forward.1} parent=11 // pred_fallthru
        _
      // Predicated region
      $region21: #{base_classifier_forward.1} parent=11 // pred_check
        %p263 = pneg %p132
      $region22: #{base_classifier_forward.1} parent=11 // pred_check_branch
        %265 = sbr.rel (%p263) target = $region24
      $region23: #{base_classifier_forward.1} parent=11 // pred_region
        _
      $region24: #{base_classifier_forward.1} parent=11 // pred_fallthru
        _
      // Predicated region
      $region25: #{base_classifier_forward.1} parent=11 // pred_check
        %p266 = pneg %p153
      $region26: #{base_classifier_forward.1} parent=11 // pred_check_branch
        %268 = sbr.rel (%p266) target = $region28
      $region27: #{base_classifier_forward.1} parent=11 // pred_region
        _
      $region28: #{base_classifier_forward.1} parent=11 // pred_fallthru
        _
      // Predicated region
      $region29: #{base_classifier_forward.1} parent=11 // pred_check
        %p269 = pneg %p174
      $region30: #{base_classifier_forward.1} parent=11 // pred_check_branch
        %271 = sbr.rel (%p269) target = $region32
      $region31: #{base_classifier_forward.1} parent=11 // pred_region
        _
      $region32: #{base_classifier_forward.1} parent=11 // pred_fallthru
        _
      // Predicated region
      $region33: #{base_classifier_forward.1} parent=11 // pred_check
        %p272 = pneg %p195
      $region34: #{base_classifier_forward.1} parent=11 // pred_check_branch
        %274 = sbr.rel (%p272) target = $region36
      $region35: #{base_classifier_forward.1} parent=11 // pred_region
        _
      $region36: #{base_classifier_forward.1} parent=11 // pred_fallthru
        _
      // Predicated region
      $region37: #{base_classifier_forward.1} parent=11 // pred_check
        %p275 = pneg %p216
      $region38: #{base_classifier_forward.1} parent=11 // pred_check_branch
        %277 = sbr.rel (%p275) target = $region40
      $region39: #{base_classifier_forward.1} parent=11 // pred_region
        _
      $region40: #{base_classifier_forward.1} parent=11 // pred_fallthru
        _
    $region12: #{base_classifier_forward.1} parent=5 // pred_fallthru
      _
    %p278 = scmp.lt.s32.totalorder %s17, 3
    // Predicated region
    $region41: #{base_classifier_forward.1} parent=5 // pred_check
      %p279 = pneg %p278
    $region42: #{base_classifier_forward.1} parent=5 // pred_check_branch
      %281 = sbr.rel (%p279) target = $region44
    $region43: #{base_classifier_forward.1} parent=5 // pred_region
      // Predicated region
      $region45: #{base_classifier_forward.1} parent=43 // pred_check
        %p282 = pneg %p37
      $region46: #{base_classifier_forward.1} parent=43 // pred_check_branch
        %284 = sbr.rel (%p282) target = $region48
      $region47: #{base_classifier_forward.1} parent=43 // pred_region
        %s285 = smul.u32 4, %s17
        %p286 = scmp.lt.s32.totalorder %s285, 11
        %s287 = scalar_select %p286, %s285, 11
        %s288 = smul.addr %s287, 8
        %s289 = scalar_lea.vmem %s0, %s288
        %s290 = smul.u32 4, %s17
      $region48: #{base_classifier_forward.1} parent=43 // pred_fallthru
        _
      // Predicated region
      $region49: #{base_classifier_forward.1} parent=43 // pred_check
        %p291 = pneg %p63
      $region50: #{base_classifier_forward.1} parent=43 // pred_check_branch
        %293 = sbr.rel (%p291) target = $region52
      $region51: #{base_classifier_forward.1} parent=43 // pred_region
        %s294 = smul.u32 4, %s17
        %p295 = scmp.lt.s32.totalorder %s294, 11
        %s296 = scalar_select %p295, %s294, 11
        %s297 = smul.addr %s296, 8
        %s298 = scalar_lea.vmem %s1, %s297
        %s299 = smul.u32 4, %s17
      $region52: #{base_classifier_forward.1} parent=43 // pred_fallthru
        _
    $region44: #{base_classifier_forward.1} parent=5 // pred_fallthru
      _
    %p300 = scmp.le.s32.totalorder 1, %s17
    %p301 = scmp.lt.s32.totalorder %s17, 4
    %p302 = pnand %p300, %p301
    %p303 = pneg %p302
    // Predicated region
    $region53: #{base_classifier_forward.1} parent=5 // pred_check
      _
    $region54: #{base_classifier_forward.1} parent=5 // pred_check_branch
      %305 = sbr.rel (%p302) target = $region56
    $region55: #{base_classifier_forward.1} parent=5 // pred_region
      %s306 = ssub.s32 %s17, 1
      %s307 = smul.u32 4, %s22
      %p308 = scmp.lt.s32.totalorder %s307, 11
      %s309 = scalar_select %p308, %s307, 11
      %s310 = smul.addr %s309, 8
      %s311 = scalar_lea.vmem %s0, %s310
      %p312 = pneg %p43
      %p313 = pneg %p40
      %s314 = smul.u32 4, %s22
      %p315 = scmp.lt.s32.totalorder %s314, 11
      %s316 = scalar_select %p315, %s314, 11
      %s317 = smul.addr %s316, 8
      %s318 = scalar_lea.vmem %s1, %s317
      %p319 = pneg %p69
      %p320 = pneg %p66
      %p321 = pneg %p90
      %p322 = pneg %p87
      %p323 = pneg %p111
      %p324 = pneg %p108
      %p325 = pneg %p132
      %p326 = pneg %p129
      %p327 = pneg %p153
      %p328 = pneg %p150
      %p329 = pneg %p174
      %p330 = pneg %p171
      %p331 = pneg %p195
      %p332 = pneg %p192
      %p333 = pneg %p216
      %p334 = pneg %p213
      %p335 = pneg %p242
      %p336 = pneg %p239
      %s337 = smul.u32 4, %s22
      %p338 = scmp.lt.s32.totalorder %s337, 11
      %s339 = scalar_select %p338, %s337, 11
      %s340 = smul.addr %s339, 8
      %s341 = scalar_lea.vmem %s9, %s340
      %s342 = smul.u32 4, %s22
      %p343 = scmp.lt.s32.totalorder %s342, 11
      %s344 = scalar_select %p343, %s342, 11
      %s345 = smul.addr %s344, 8
      %s346 = scalar_lea.vmem %s0, %s345
      %s347 = smul.u32 4, %s22
      %s348 = smul.u32 4, %s22
      %p349 = scmp.lt.s32.totalorder %s348, 11
      %s350 = scalar_select %p349, %s348, 11
      %s351 = smul.addr %s350, 8
      %s352 = scalar_lea.vmem %s1, %s351
      %s353 = smul.u32 4, %s22
      %s354 = smul.u32 4, %s22
      %p355 = scmp.lt.s32.totalorder %s354, 11
      %s356 = scalar_select %p355, %s354, 11
      %s357 = smul.addr %s356, 8
      %s358 = scalar_lea.vmem %s9, %s357
      %s359 = smul.u32 4, %s22
      %v361 = vld [vmem:[%s346] sm:$0xff]
      %v362 = vld [vmem:[%s346 + $0x8] sm:$0xff]
      %v363 = vld [vmem:[%s346 + $0x10] sm:$0xff]
      %v364 = vld [vmem:[%s346 + $0x18] sm:$0xff]
      %v365 = vpack.c.bf16 %v362, %v361
      %v366 = vpack.c.bf16 %v364, %v363
      %v367 = vld [vmem:[%s352] sm:$0xff]
      %v368 = vld [vmem:[%s352 + $0x8] sm:$0xff]
      %v369 = vld [vmem:[%s352 + $0x10] sm:$0xff]
      %v370 = vld [vmem:[%s352 + $0x18] sm:$0xff]
      %v371 = vpack.c.bf16 %v368, %v367
      %v372 = vpack.c.bf16 %v370, %v369
      %v373 = vld [vmem:[%s2] sm:$0xff]
      %v374 = vld [vmem:[%s2 + $0x8] sm:$0xff]
      %v375 = vld [vmem:[%s3] sm:$0xff]
      %v376 = vld [vmem:[%s3 + $0x8] sm:$0xff]
      %v379 = vunpack.c.l.b16 %v375
      %v380 = vunpack.c.h.b16 %v375
      %v381 = vunpack.c.l.b16 %v376
      %v382 = vunpack.c.h.b16 %v376
      %v383 = vpack.c.b16 %v381, %v379
      %v384 = vpack.c.b16 %v382, %v380
      %vm387 = vcmask 130048
      %v389 = vsel %vm387, %v371, 0
      %v392 = vsel %vm387, %v372, 0
      %394 = vmatprep.subr.bf16.mxu0 %v384
      %395 = vmatpush1.bf16.msra.mxu0 %v383
      %396 = vmatprep.subr.bf16.mxu0 0
      %397 = vmatpush1.bf16.msra.mxu0 0
      %398 = vmatprep.subr.bf16.mxu0 0
      %399 = vmatpush1.bf16.msra.mxu0 0
      %400 = vmatprep.subr.bf16.mxu0 0
      %401 = vmatpush1.bf16.msra.mxu0 0
      %402 = vmatprep.subr.bf16.mxu0 0
      %403 = vmatpush1.bf16.msra.mxu0 0
      %404 = vmatprep.subr.bf16.mxu0 0
      %405 = vmatpush1.bf16.msra.mxu0 0
      %406 = vmatprep.subr.bf16.mxu0 0
      %407 = vmatpush1.bf16.msra.mxu0 0
      %408 = vmatprep.subr.bf16.mxu0 0
      %409 = vmatpush1.bf16.msra.mxu0 0
      %410 = vmatprep.subr.bf16.mxu0 0
      %411 = vmatpush1.bf16.msra.mxu0 0
      %412 = vmatprep.subr.bf16.mxu0 0
      %413 = vmatpush1.bf16.msra.mxu0 0
      %414 = vmatprep.subr.bf16.mxu0 0
      %415 = vmatpush1.bf16.msra.mxu0 0
      %416 = vmatprep.subr.bf16.mxu0 0
      %417 = vmatpush1.bf16.msra.mxu0 0
      %418 = vmatprep.subr.bf16.mxu0 0
      %419 = vmatpush1.bf16.msra.mxu0 0
      %420 = vmatprep.subr.bf16.mxu0 0
      %421 = vmatpush1.bf16.msra.mxu0 0
      %422 = vmatprep.subr.bf16.mxu0 0
      %423 = vmatpush1.bf16.msra.mxu0 0
      %424 = vmatprep.subr.bf16.mxu0 0
      %425 = vmatpush1.bf16.msra.mxu0 0
      %426 = vmatprep.mubr.bf16.mxu0 0
      %427 = vmatmul.mubr.bf16.gmra.mrb[0].mxu0 %v389
      %v428 = vpop.f32.mrb[0].mxu0
      %v429 = vadd.f32 0.0, %v428
      %v430 = vpop.f32.mrb[0].mxu0
      %v431 = vadd.f32 0.0, %v430
      %v432 = vpop.f32.mrb[0].mxu0
      %v433 = vadd.f32 0.0, %v432
      %v434 = vpop.f32.mrb[0].mxu0
      %v435 = vadd.f32 0.0, %v434
      %436 = vmatprep.mubr.bf16.mxu0 0
      %437 = vmatmul.mubr.bf16.gmra.mrb[0].mxu0 %v392
      %v438 = vpop.f32.mrb[0].mxu0
      %v439 = vadd.f32 0.0, %v438
      %v440 = vpop.f32.mrb[0].mxu0
      %v441 = vadd.f32 0.0, %v440
      %v442 = vpop.f32.mrb[0].mxu0
      %v443 = vadd.f32 0.0, %v442
      %v444 = vpop.f32.mrb[0].mxu0
      %v445 = vadd.f32 0.0, %v444
      %446 = vdwg.mxu0
      %v449 = vunpack.c.l.b16 %v373
      %v450 = vunpack.c.h.b16 %v373
      %v451 = vunpack.c.l.b16 %v374
      %v452 = vunpack.c.h.b16 %v374
      %v453 = vpack.c.b16 %v451, %v449
      %v454 = vpack.c.b16 %v452, %v450
      %v458 = vsel %vm387, %v365, 0
      %v461 = vsel %vm387, %v366, 0
      %463 = vmatprep.subr.bf16.mxu0 %v454
      %464 = vmatpush1.bf16.msra.mxu0 %v453
      %465 = vmatprep.subr.bf16.mxu0 0
      %466 = vmatpush1.bf16.msra.mxu0 0
      %467 = vmatprep.subr.bf16.mxu0 0
      %468 = vmatpush1.bf16.msra.mxu0 0
      %469 = vmatprep.subr.bf16.mxu0 0
      %470 = vmatpush1.bf16.msra.mxu0 0
      %471 = vmatprep.subr.bf16.mxu0 0
      %472 = vmatpush1.bf16.msra.mxu0 0
      %473 = vmatprep.subr.bf16.mxu0 0
      %474 = vmatpush1.bf16.msra.mxu0 0
      %475 = vmatprep.subr.bf16.mxu0 0
      %476 = vmatpush1.bf16.msra.mxu0 0
      %477 = vmatprep.subr.bf16.mxu0 0
      %478 = vmatpush1.bf16.msra.mxu0 0
      %479 = vmatprep.subr.bf16.mxu0 0
      %480 = vmatpush1.bf16.msra.mxu0 0
      %481 = vmatprep.subr.bf16.mxu0 0
      %482 = vmatpush1.bf16.msra.mxu0 0
      %483 = vmatprep.subr.bf16.mxu0 0
      %484 = vmatpush1.bf16.msra.mxu0 0
      %485 = vmatprep.subr.bf16.mxu0 0
      %486 = vmatpush1.bf16.msra.mxu0 0
      %487 = vmatprep.subr.bf16.mxu0 0
      %488 = vmatpush1.bf16.msra.mxu0 0
      %489 = vmatprep.subr.bf16.mxu0 0
      %490 = vmatpush1.bf16.msra.mxu0 0
      %491 = vmatprep.subr.bf16.mxu0 0
      %492 = vmatpush1.bf16.msra.mxu0 0
      %493 = vmatprep.subr.bf16.mxu0 0
      %494 = vmatpush1.bf16.msra.mxu0 0
      %495 = vmatprep.mubr.bf16.mxu0 0
      %496 = vmatmul.mubr.bf16.gmra.mrb[0].mxu0 %v458
      %v497 = vpop.f32.mrb[0].mxu0
      %v498 = vadd.f32 %v429, %v497
      %v499 = vpop.f32.mrb[0].mxu0
      %v500 = vadd.f32 %v431, %v499
      %v501 = vpop.f32.mrb[0].mxu0
      %v502 = vadd.f32 %v433, %v501
      %v503 = vpop.f32.mrb[0].mxu0
      %v504 = vadd.f32 %v435, %v503
      %505 = vmatprep.mubr.bf16.mxu0 0
      %506 = vmatmul.mubr.bf16.gmra.mrb[0].mxu0 %v461
      %v507 = vpop.f32.mrb[0].mxu0
      %v508 = vadd.f32 %v439, %v507
      %v509 = vpop.f32.mrb[0].mxu0
      %v510 = vadd.f32 %v441, %v509
      %v511 = vpop.f32.mrb[0].mxu0
      %v512 = vadd.f32 %v443, %v511
      %v513 = vpop.f32.mrb[0].mxu0
      %v514 = vadd.f32 %v445, %v513
      %515 = vdwg.mxu0
      %v516 = vld [vmem:[%s4] sm:$0x3]
      %v518 = vlaneseq
      %v519 = vshrl.u32 %v518, 7
      %v520 = vsub.s32 0, %v519
      %v521 = vrot.slane %v516, %v520
      %v522 = vlaneseq
      %v523 = vshrl.u32 %v522, 7
      %v524 = vsub.s32 1, %v523
      %v525 = vrot.slane %v516, %v524
      %v528 = vadd.f32 %v498, %v521
      %v529 = vadd.f32 %v500, %v525
      %v530 = vadd.f32 %v502, %v521
      %v531 = vadd.f32 %v504, %v525
      %v532 = vadd.f32 %v508, %v521
      %v533 = vadd.f32 %v510, %v525
      %v534 = vadd.f32 %v512, %v521
      %v535 = vadd.f32 %v514, %v525
      %v536 = vmax.f32 %v528, 0.0
      %v537 = vmax.f32 %v529, 0.0
      %v538 = vmax.f32 %v530, 0.0
      %v539 = vmax.f32 %v531, 0.0
      %v540 = vmax.f32 %v532, 0.0
      %v541 = vmax.f32 %v533, 0.0
      %v542 = vmax.f32 %v534, 0.0
      %v543 = vmax.f32 %v535, 0.0
      %v544 = vpack.c.bf16 %v538, %v536
      %v545 = vpack.c.bf16 %v539, %v537
      %v546 = vpack.c.bf16 %v542, %v540
      %v547 = vpack.c.bf16 %v543, %v541
      %v548 = vld [vmem:[%s5] sm:$0xf]
      %v549 = vld [vmem:[%s5 + $0x4] sm:$0xf]
      %v550 = vld [vmem:[%s5 + $0x8] sm:$0xf]
      %v551 = vld [vmem:[%s5 + $0xc] sm:$0xf]
      %v552 = vld [vmem:[%s5 + $0x10] sm:$0xf]
      %v553 = vld [vmem:[%s5 + $0x14] sm:$0xf]
      %v554 = vld [vmem:[%s5 + $0x18] sm:$0xf]
      %v555 = vld [vmem:[%s5 + $0x1c] sm:$0xf]
      %v556 = vld [vmem:[%s5 + $0x20] sm:$0xf]
      %v557 = vld [vmem:[%s5 + $0x24] sm:$0xf]
      %v558 = vld [vmem:[%s5 + $0x28] sm:$0xf]
      %v559 = vld [vmem:[%s5 + $0x2c] sm:$0xf]
      %v560 = vld [vmem:[%s5 + $0x30] sm:$0xf]
      %v561 = vld [vmem:[%s5 + $0x34] sm:$0xf]
      %v562 = vld [vmem:[%s5 + $0x38] sm:$0xf]
      %v563 = vld [vmem:[%s5 + $0x3c] sm:$0xf]
      %v564 = vld [vmem:[%s5 + $0x40] sm:$0xf]
      %v565 = vld [vmem:[%s5 + $0x44] sm:$0xf]
      %v566 = vld [vmem:[%s5 + $0x48] sm:$0xf]
      %v567 = vld [vmem:[%s5 + $0x4c] sm:$0xf]
      %v568 = vld [vmem:[%s5 + $0x50] sm:$0xf]
      %v569 = vld [vmem:[%s5 + $0x54] sm:$0xf]
      %v570 = vld [vmem:[%s5 + $0x58] sm:$0xf]
      %v571 = vld [vmem:[%s5 + $0x5c] sm:$0xf]
      %v572 = vld [vmem:[%s5 + $0x60] sm:$0xf]
      %v573 = vld [vmem:[%s6] sm:$0x1]
      %v575 = vlaneseq
      %v576 = vshrl.u32 %v575, 7
      %v577 = vsub.s32 0, %v576
      %v578 = vrot.slane %v573, %v577
      %v605 = vunpack.c.l.b16 %v548
      %v606 = vunpack.c.l.b16 %v549
      %v607 = vunpack.c.l.b16 %v550
      %v608 = vunpack.c.l.b16 %v551
      %v609 = vunpack.c.l.b16 %v552
      %v610 = vunpack.c.l.b16 %v553
      %v611 = vunpack.c.l.b16 %v554
      %v612 = vunpack.c.l.b16 %v555
      %v613 = vunpack.c.l.b16 %v556
      %v614 = vunpack.c.l.b16 %v557
      %v615 = vunpack.c.l.b16 %v558
      %v616 = vunpack.c.l.b16 %v559
      %v617 = vunpack.c.l.b16 %v560
      %v618 = vunpack.c.l.b16 %v561
      %v619 = vunpack.c.l.b16 %v562
      %v620 = vunpack.c.l.b16 %v563
      %v621 = vunpack.c.l.b16 %v564
      %v622 = vunpack.c.l.b16 %v565
      %v623 = vunpack.c.l.b16 %v566
      %v624 = vunpack.c.l.b16 %v567
      %v625 = vunpack.c.l.b16 %v568
      %v626 = vunpack.c.l.b16 %v569
      %v627 = vunpack.c.l.b16 %v570
      %v628 = vunpack.c.l.b16 %v571
      %v629 = vunpack.c.l.b16 %v572
      %v630 = vpack.c.b16 %v606, %v605
      %v631 = vpack.c.b16 %v608, %v607
      %v632 = vpack.c.b16 %v610, %v609
      %v633 = vpack.c.b16 %v612, %v611
      %v634 = vpack.c.b16 %v614, %v613
      %v635 = vpack.c.b16 %v616, %v615
      %v636 = vpack.c.b16 %v618, %v617
      %v637 = vpack.c.b16 %v620, %v619
      %v638 = vpack.c.b16 %v622, %v621
      %v639 = vpack.c.b16 %v624, %v623
      %v640 = vpack.c.b16 %v626, %v625
      %v641 = vpack.c.b16 %v628, %v627
      %v642 = vpack.c.b16 %v629, %v629
      %vm655 = vcmask 588800
      %v657 = vsel %vm655, %v545, 0
      %v660 = vsel %vm655, %v547, 0
      %vm662 = vcmask 1043456
      %v664 = vsel %vm662, %v642, 0
      %666 = vmatprep.subr.bf16.mxu0 0
      %667 = vmatpush1.bf16.msra.mxu0 %v630
      %668 = vmatprep.subr.bf16.mxu0 0
      %669 = vmatpush1.bf16.msra.mxu0 %v631
      %670 = vmatprep.subr.bf16.mxu0 0
      %671 = vmatpush1.bf16.msra.mxu0 %v632
      %672 = vmatprep.subr.bf16.mxu0 0
      %673 = vmatpush1.bf16.msra.mxu0 %v633
      %674 = vmatprep.subr.bf16.mxu0 0
      %675 = vmatpush1.bf16.msra.mxu0 %v634
      %676 = vmatprep.subr.bf16.mxu0 0
      %677 = vmatpush1.bf16.msra.mxu0 %v635
      %678 = vmatprep.subr.bf16.mxu0 0
      %679 = vmatpush1.bf16.msra.mxu0 %v636
      %680 = vmatprep.subr.bf16.mxu0 0
      %681 = vmatpush1.bf16.msra.mxu0 %v637
      %682 = vmatprep.subr.bf16.mxu0 0
      %683 = vmatpush1.bf16.msra.mxu0 %v638
      %684 = vmatprep.subr.bf16.mxu0 0
      %685 = vmatpush1.bf16.msra.mxu0 %v639
      %686 = vmatprep.subr.bf16.mxu0 0
      %687 = vmatpush1.bf16.msra.mxu0 %v640
      %688 = vmatprep.subr.bf16.mxu0 0
      %689 = vmatpush1.bf16.msra.mxu0 %v641
      %690 = vmatprep.subr.bf16.mxu0 0
      %691 = vmatpush1.bf16.msra.mxu0 %v664
      %692 = vmatprep.subr.bf16.mxu0 0
      %693 = vmatpush1.bf16.msra.mxu0 0
      %694 = vmatprep.subr.bf16.mxu0 0
      %695 = vmatpush1.bf16.msra.mxu0 0
      %696 = vmatprep.subr.bf16.mxu0 0
      %697 = vmatpush1.bf16.msra.mxu0 0
      %698 = vmatprep.mubr.bf16.mxu0 %v657
      %699 = vmatmul.mubr.bf16.gmra.mrb[0].mxu0 %v544
      %v700 = vpop.f32.mrb[0].mxu0
      %v701 = vadd.f32 %v578, %v700
      %v702 = vpop.f32.mrb[0].mxu0
      %v703 = vpop.f32.mrb[0].mxu0
      %v704 = vadd.f32 %v578, %v703
      %v705 = vpop.f32.mrb[0].mxu0
      %706 = vmatprep.mubr.bf16.mxu0 %v660
      %707 = vmatmul.mubr.bf16.gmra.mrb[0].mxu0 %v546
      %v708 = vpop.f32.mrb[0].mxu0
      %v709 = vadd.f32 %v578, %v708
      %v710 = vpop.f32.mrb[0].mxu0
      %v711 = vpop.f32.mrb[0].mxu0
      %v712 = vadd.f32 %v578, %v711
      %v713 = vpop.f32.mrb[0].mxu0
      %714 = vdwg.mxu0
      %v715 = vmax.f32 %v701, 0.0
      %v716 = vmax.f32 %v704, 0.0
      %v717 = vmax.f32 %v709, 0.0
      %v718 = vmax.f32 %v712, 0.0
      %v719 = vld [vmem:[%s7] sm:$0x1]
      %v721 = vlaneseq
      %v722 = vshrl.u32 %v721, 7
      %v723 = vsub.s32 0, %v722
      %v724 = vrot.slane %v719, %v723
      %v726 = vmul.f32 %v715, %v724
      %v727 = vmul.f32 %v716, %v724
      %v728 = vmul.f32 %v717, %v724
      %v729 = vmul.f32 %v718, %v724
      %vm730 = vcmask 408576
      %v731 = vsel %vm730, %v726, 0.0
      %732 = vadd.xlane.f32.xlu0 %v731
      %v733 = vpop.xlane.xlu0 %732
      %v734 = vsel %vm730, %v727, 0.0
      %735 = vadd.xlane.f32.xlu0 %v734
      %v736 = vpop.xlane.xlu0 %735
      %v737 = vsel %vm730, %v728, 0.0
      %738 = vadd.xlane.f32.xlu0 %v737
      %v739 = vpop.xlane.xlu0 %738
      %v740 = vsel %vm730, %v729, 0.0
      %741 = vadd.xlane.f32.xlu0 %v740
      %v742 = vpop.xlane.xlu0 %741
      %v743 = vld [vmem:[#allocation2] sm:$0x1]
      %v745 = vlaneseq
      %v746 = vshrl.u32 %v745, 7
      %v747 = vsub.s32 0, %v746
      %v748 = vrot.slane %v743, %v747
      %v750 = vadd.f32 %v733, %v748
      %v751 = vadd.f32 %v736, %v748
      %v752 = vadd.f32 %v739, %v748
      %v753 = vadd.f32 %v742, %v748
      %v754 = vsub.f32 0.0, %v750
      %v755 = vsub.f32 0.0, %v751
      %v756 = vsub.f32 0.0, %v752
      %v757 = vsub.f32 0.0, %v753
      %v758 = vmul.f32 %v754, 1.442695
      %v759 = vpow.pop %v758
      %v760 = vmul.f32 %v755, 1.442695
      %v761 = vpow.pop %v760
      %v762 = vmul.f32 %v756, 1.442695
      %v763 = vpow.pop %v762
      %v764 = vmul.f32 %v757, 1.442695
      %v765 = vpow.pop %v764
      %v766 = vadd.f32 %v759, 1.0
      %v767 = vadd.f32 %v761, 1.0
      %v768 = vadd.f32 %v763, 1.0
      %v769 = vadd.f32 %v765, 1.0
      %v770 = vrcp.pop %v766
      %v771 = vrcp.pop %v767
      %v772 = vrcp.pop %v768
      %v773 = vrcp.pop %v769
      %vm774 = vcmask 7168
      %775 = vst.msk [vmem:[%s358] sm:$0xff] %vm774, %v770
      %776 = vst.msk [vmem:[%s358 + $0x8] sm:$0xff] %vm774, %v771
      %777 = vst.msk [vmem:[%s358 + $0x10] sm:$0xff] %vm774, %v772
      %778 = vst.msk [vmem:[%s358 + $0x18] sm:$0xff] %vm774, %v773
      %s779 = smul.u32 4, %s22
      %p780 = scmp.lt.s32.totalorder %s779, 11
      %s781 = scalar_select %p780, %s779, 11
      %s782 = smul.addr %s781, 8
      %s783 = scalar_lea.vmem %s9, %s782
      // Predicated region
      $region57: #{base_classifier_forward.1} parent=55 // pred_check
        %p784 = pneg %p239
      $region58: #{base_classifier_forward.1} parent=55 // pred_check_branch
        %786 = sbr.rel (%p784) target = $region60
      $region59: #{base_classifier_forward.1} parent=55 // pred_region
        %s787 = smul.u32 4, %s22
      $region60: #{base_classifier_forward.1} parent=55 // pred_fallthru
        _
    $region56: #{base_classifier_forward.1} parent=5 // pred_fallthru
      _
    %p788 = scmp.le.s32.totalorder 2, %s17
    // Predicated region
    $region61: #{base_classifier_forward.1} parent=5 // pred_check
      %p789 = pneg %p788
    $region62: #{base_classifier_forward.1} parent=5 // pred_check_branch
      %791 = sbr.rel (%p789) target = $region64
    $region63: #{base_classifier_forward.1} parent=5 // pred_region
      %s792 = ssub.s32 %s17, 2
      // Predicated region
      $region65: #{base_classifier_forward.1} parent=63 // pred_check
        %p793 = pneg %p245
      $region66: #{base_classifier_forward.1} parent=63 // pred_check_branch
        %795 = sbr.rel (%p793) target = $region68
      $region67: #{base_classifier_forward.1} parent=63 // pred_region
        %s796 = smul.u32 4, %s23
        %p797 = scmp.lt.s32.totalorder %s796, 11
        %s798 = scalar_select %p797, %s796, 11
        %s799 = smul.addr %s798, 8
        %s800 = scalar_lea.vmem %s9, %s799
      $region68: #{base_classifier_forward.1} parent=63 // pred_fallthru
        _
    $region64: #{base_classifier_forward.1} parent=5 // pred_fallthru
      _
  $region6: #{base_classifier_forward.1} parent=0 // loop_footer
    %s21 = sadd.s32 1, %s17
  $region7: #{base_classifier_forward.1} parent=0 // loop_footer_branch
    %16 = sbr.rel target = $region3
  $region8: #{base_classifier_forward.1} parent=0 // loop_exit
    _

</llo_original>
